<compile_context>
chip_gen: v7x
topology: tpu7x:2x2x1
jax: 0.10.0
libtpu: 0.0.40
codegen_flags: <defaults>
</compile_context>

<pallas_src>
import functools

import jax
import jax.numpy as jnp
from jax.experimental import pallas as pl
from jax.experimental.pallas import tpu as pltpu


def _lm_criterion_kernel(inp_ref, tgt_ref, msk_ref, out_ref, *,
                         n_tokens, tile_n, needs_tail_mask):
    # Cast in-register AFTER the load (HBM stream stays in the native dtype).
    inp = inp_ref[...].astype(jnp.float32)      # (tile_n, V)
    tgt = tgt_ref[...]                          # (tile_n, 1) int32
    msk = msk_ref[...]                          # (tile_n, 1) float32

    # Lane-dense one-hot gather: iota only along the vocab (lane) axis,
    # broadcast against the target column.
    vocab_ids = jax.lax.broadcasted_iota(jnp.int32, (1, inp.shape[1]), 1)   # (1, V)
    picked = jnp.where(vocab_ids == tgt, inp, 0.0)                          # (tile_n, V)
    gathered = jnp.sum(picked, axis=1, keepdims=True)                       # (tile_n, 1)

    contrib = -gathered * msk                                               # (tile_n, 1)
    if needs_tail_mask:
        # Rows past the real token count come from an out-of-bounds input block
        # (unspecified values); discard them exactly (NaN-safe via `where`).
        rows = (pl.program_id(0) * tile_n
                + jax.lax.broadcasted_iota(jnp.int32, contrib.shape, 0))
        contrib = jnp.where(rows < n_tokens, contrib, 0.0)

    partial = jnp.sum(contrib)                                              # scalar
    # Lane-dense partial output; the wrapper reads lane 0 of each block.
    out_ref[...] = jnp.broadcast_to(partial, out_ref.shape)


def _vmem_budget():
    """(per-block input budget, vmem_limit_bytes) derived from physical VMEM."""
    try:
        phys = int(pltpu.get_tpu_info().vmem_capacity_bytes)
    except Exception:
        phys = 64 << 20  # conservative: assume the smallest (v7x per-TC VMEM)
    block_budget = phys // 4          # double-buffered inputs -> ~phys/2
    vmem_limit = (phys * 3) // 4      # leave headroom under physical VMEM
    return block_budget, vmem_limit


def _pick_tile_n(n_tokens, vocab, in_itemsize, budget_bytes):
    """Largest multiple-of-8 token tile whose per-block stream fits the budget."""
    bytes_per_row = vocab * in_itemsize + 8       # input row + target(i32) + mask(f32)
    tile = budget_bytes // max(bytes_per_row, 1)
    tile = max(8, (tile // 8) * 8)
    n_ceil = ((n_tokens + 7) // 8) * 8
    return min(tile, n_ceil)


def language_model_criterion(inp, target, mask, *, tile_n=None):
    """Pallas equivalent of LanguageModelCriterion.forward. Returns a scalar f32."""
    B, T, V = inp.shape
    target = target[:, :T].astype(jnp.int32)      # target[:, :input.size(1)]
    mask = mask[:, :T].astype(jnp.float32)        # mask[:, :input.size(1)]

    N = B * T
    inp_flat = inp.reshape(N, V)                  # native dtype, no upcast copy
    tgt_flat = target.reshape(N, 1)
    msk_flat = mask.reshape(N, 1)

    # Denominator is a tiny reduction -- do it in the wrapper.
    denom = jnp.sum(msk_flat)

    block_budget, vmem_limit = _vmem_budget()
    if tile_n is None:
        tile_n = _pick_tile_n(N, V, inp_flat.dtype.itemsize, block_budget)
    n_ceil = ((N + 7) // 8) * 8
    tile_n = min(max(8, (int(tile_n) // 8) * 8), n_ceil)

    num_blocks = pl.cdiv(N, tile_n)
    n_pad = num_blocks * tile_n
    if n_pad != N:
        # Pad only the tiny target/mask arrays (mask=0 for padded rows).  The big
        # input tensor stays unpadded; its tail block is masked in-kernel.
        pad = n_pad - N
        tgt_flat = jnp.pad(tgt_flat, ((0, pad), (0, 0)))
        msk_flat = jnp.pad(msk_flat, ((0, pad), (0, 0)))

    kernel = functools.partial(
        _lm_criterion_kernel,
        n_tokens=N, tile_n=tile_n, needs_tail_mask=(n_pad != N))

    partials = pl.pallas_call(
        kernel,
        out_shape=jax.ShapeDtypeStruct((num_blocks, 1, 128), jnp.float32),
        grid_spec=pltpu.PrefetchScalarGridSpec(
            num_scalar_prefetch=0,
            grid=(num_blocks,),
            in_specs=[
                pl.BlockSpec((tile_n, V), lambda i: (i, 0)),
                pl.BlockSpec((tile_n, 1), lambda i: (i, 0)),
                pl.BlockSpec((tile_n, 1), lambda i: (i, 0)),
            ],
            out_specs=pl.BlockSpec((1, 1, 128), lambda i: (i, 0, 0)),
        ),
        compiler_params=pltpu.CompilerParams(
            dimension_semantics=("parallel",),          # independent blocks -> 2 TCs on v7x
            vmem_limit_bytes=int(vmem_limit),
        ),
    )(inp_flat, tgt_flat, msk_flat)

    numer = jnp.sum(partials[:, 0, 0])
    return numer / denom


def _reference(inp, target, mask):
    B, T, V = inp.shape
    target = target[:, :T]
    mask = mask[:, :T].astype(jnp.float32)
    gathered = jnp.take_along_axis(inp, target[:, :, None], axis=2)[:, :, 0]
    out = -gathered * mask
    return jnp.sum(out) / jnp.sum(mask)


if __name__ == "__main__":
    # --- Test 1: small f32 case, single token block. ---
    B, T, V = 4, 8, 128
    T_FULL = T + 3                     # target/mask longer than T to exercise truncation
    k1, k2, k3 = jax.random.split(jax.random.PRNGKey(0), 3)
    logits = jax.random.normal(k1, (B, T, V), dtype=jnp.float32)
    inp = jax.nn.log_softmax(logits, axis=-1)
    target = jax.random.randint(k2, (B, T_FULL), 0, V, dtype=jnp.int32)
    lengths = jax.random.randint(k3, (B, 1), 1, T_FULL + 1, dtype=jnp.int32)
    mask = (jnp.arange(T_FULL)[None, :] < lengths).astype(jnp.float32)

    out = jax.block_until_ready(language_model_criterion(inp, target, mask))
    ref = _reference(inp, target, mask)
    assert jnp.allclose(out, ref, rtol=1e-5, atol=1e-5), (out, ref)

    # --- Test 2: bf16 input (native-dtype streaming), multi-block + ragged tail
    #     (N = 5*7 = 35 tokens, tile_n = 8 -> 5 blocks, last block padded/masked). ---
    B2, T2, V2 = 5, 7, 256
    T2_FULL = T2 + 2
    k4, k5, k6 = jax.random.split(jax.random.PRNGKey(1), 3)
    logits2 = jax.random.normal(k4, (B2, T2, V2), dtype=jnp.float32)
    inp2 = jax.nn.log_softmax(logits2, axis=-1).astype(jnp.bfloat16)
    target2 = jax.random.randint(k5, (B2, T2_FULL), 0, V2, dtype=jnp.int32)
    lengths2 = jax.random.randint(k6, (B2, 1), 1, T2_FULL + 1, dtype=jnp.int32)
    mask2 = (jnp.arange(T2_FULL)[None, :] < lengths2).astype(jnp.float32)

    out2 = jax.block_until_ready(
        language_model_criterion(inp2, target2, mask2, tile_n=8))
    ref2 = _reference(inp2, target2, mask2)
    assert jnp.allclose(out2, ref2, rtol=1e-4, atol=1e-4), (out2, ref2)

    print("KERNEL_OK")
</pallas_src>

<mosaic_0001>
module attributes {stable_mosaic.version = 11 : i64} {
  func.func @_lm_criterion_kernel(%arg0: i32, %arg1: memref<32x128xf32, #tpu.memory_space<vmem>>, %arg2: memref<32x1xi32, #tpu.memory_space<vmem>>, %arg3: memref<32x1xf32, #tpu.memory_space<vmem>>, %arg4: memref<1x1x128xf32, #tpu.memory_space<vmem>>) attributes {dimension_semantics = [#tpu.dimension_semantics<parallel>], iteration_bounds = array<i64: 1>, scalar_prefetch = 0 : i64, scratch_operands = 0 : i64, tpu.core_type = #tpu.core_type<tc>, window_params = [{transform_indices = @transform_0, window_bounds = array<i64: 32, 128>}, {transform_indices = @transform_1, window_bounds = array<i64: 32, 1>}, {transform_indices = @transform_2, window_bounds = array<i64: 32, 1>}, {transform_indices = @transform_3, window_bounds = array<i64: 1, 1, 128>}]} {
    %c0 = arith.constant 0 : index
    %c0_0 = arith.constant 0 : index
    %0 = vector.load %arg1[%c0, %c0_0] : memref<32x128xf32, #tpu.memory_space<vmem>>, vector<32x128xf32>
    %c0_1 = arith.constant 0 : index
    %c0_2 = arith.constant 0 : index
    %1 = vector.load %arg2[%c0_1, %c0_2] : memref<32x1xi32, #tpu.memory_space<vmem>>, vector<32x1xi32>
    %c0_3 = arith.constant 0 : index
    %c0_4 = arith.constant 0 : index
    %2 = vector.load %arg3[%c0_3, %c0_4] : memref<32x1xf32, #tpu.memory_space<vmem>>, vector<32x1xf32>
    %3 = tpu.iota {dimensions = array<i32: 1>} : vector<1x128xi32>
    %4 = vector.broadcast %3 : vector<1x128xi32> to vector<32x128xi32>
    %5 = vector.broadcast %1 : vector<32x1xi32> to vector<32x128xi32>
    %6 = arith.cmpi eq, %4, %5 : vector<32x128xi32>
    %cst = arith.constant 0.000000e+00 : f32
    %7 = vector.broadcast %cst : f32 to vector<32x128xf32>
    %8 = arith.select %6, %0, %7 : vector<32x128xi1>, vector<32x128xf32>
    %cst_5 = arith.constant dense<0.000000e+00> : vector<32xf32>
    %9 = vector.multi_reduction <add>, %8, %cst_5 [1] : vector<32x128xf32> to vector<32xf32>
    %10 = vector.shape_cast %9 : vector<32xf32> to vector<32x1xf32>
    %cst_6 = arith.constant 0.000000e+00 : f32
    %11 = vector.broadcast %cst_6 : f32 to vector<32x1xf32>
    %12 = arith.subf %11, %10 : vector<32x1xf32>
    %13 = arith.mulf %12, %2 : vector<32x1xf32>
    %14 = vector.shape_cast %13 : vector<32x1xf32> to vector<1x32x1xf32>
    %cst_7 = arith.constant dense<0.000000e+00> : vector<1xf32>
    %15 = vector.multi_reduction <add>, %14, %cst_7 [1, 2] : vector<1x32x1xf32> to vector<1xf32>
    %16 = vector.shape_cast %15 : vector<1xf32> to vector<1x1x1xf32>
    %17 = vector.extract %16[0, 0, 0] : f32 from vector<1x1x1xf32>
    %18 = vector.broadcast %17 : f32 to vector<1x1x128xf32>
    %c0_8 = arith.constant 0 : index
    %c0_9 = arith.constant 0 : index
    %c0_10 = arith.constant 0 : index
    %19 = vector.load %arg4[%c0_8, %c0_9, %c0_10] : memref<1x1x128xf32, #tpu.memory_space<vmem>>, vector<1x1x128xf32>
    tpu.vector_store %arg4[%c0_8, %c0_9, %c0_10], %18 {strides = array<i32>} : memref<1x1x128xf32, #tpu.memory_space<vmem>>, vector<1x1x128xf32>,
    return
  }
  func.func @transform_0(%arg0: i32) -> (i32, i32) {
    %c0_i32 = arith.constant 0 : i32
    %c0_i32_0 = arith.constant 0 : i32
    return %arg0, %c0_i32 : i32, i32
  }
  func.func @transform_1(%arg0: i32) -> (i32, i32) {
    %c0_i32 = arith.constant 0 : i32
    %c0_i32_0 = arith.constant 0 : i32
    return %arg0, %c0_i32 : i32, i32
  }
  func.func @transform_2(%arg0: i32) -> (i32, i32) {
    %c0_i32 = arith.constant 0 : i32
    %c0_i32_0 = arith.constant 0 : i32
    return %arg0, %c0_i32 : i32, i32
  }
  func.func @transform_3(%arg0: i32) -> (i32, i32, i32) {
    %c0_i32 = arith.constant 0 : i32
    %c0_i32_0 = arith.constant 0 : i32
    %c0_i32_1 = arith.constant 0 : i32
    return %arg0, %c0_i32, %c0_i32_0 : i32, i32, i32
  }
}

</mosaic_0001>

<llo_original>
// kernel: tpu_custom_call.1
$region0: #{tpu_custom_call.1}
  #allocation0 [shape = 'u32[]', space=smem, size = 0x4, offset = 0x4, fixed_abs, tag = 'smem constant byte address 0x4 - core index']
  #allocation1 [shape = 'u32[144,128]{1,0:T(1,128)}', space=vmem, size = 0x12000, scoped, tag = 'internal scratch']
  %s0 = inlined_call_operand.vmem [shape: f32[32,128], index: 0, kind: input, shape index: {}]
  %s1 = inlined_call_operand.vmem [shape: s32[32,1], index: 1, kind: input, shape index: {}]
  %s2 = inlined_call_operand.vmem [shape: f32[32,1], index: 2, kind: input, shape index: {}]
  %s3 = inlined_call_operand.hbm [shape: f32[1,1,128], index: 3, kind: output, shape index: {}]
  %s4 = sld [smem:[#allocation0]]
  $region22: #{tpu_custom_call.1} parent=0
    _
  %s6 = ssub.s32 1, %s4
  %s7 = scalar_select 0, %s6, %s4
  $region1: #{tpu_custom_call.1} parent=0
    #allocation2 [shape = 'u8[512]{0}', space=vmem, size = 0x400, scoped, tag = 'output window, operand 0, single buffered']
    #allocation3 [shape = 's32[1]{0}', space=sflag, size = 0x4, scoped, tag = 'scoped memory for tpu_custom_call.1']
    %8 = vsyncpa [#allocation3], 0
    // Predicated region
    $region2: #{tpu_custom_call.1} parent=1 // pred_check
      _
    $region3: #{tpu_custom_call.1} parent=1 // pred_check_branch
      %10 = sbr.rel (0) target = $region5
    $region4: #{tpu_custom_call.1} parent=1 // pred_region
      _
    $region5: #{tpu_custom_call.1} parent=1 // pred_fallthru
      _
    // Predicated region
    $region6: #{tpu_custom_call.1} parent=1 // pred_check
      _
    $region7: #{tpu_custom_call.1} parent=1 // pred_check_branch
      %12 = sbr.rel (0) target = $region9
    $region8: #{tpu_custom_call.1} parent=1 // pred_region
      _
    $region9: #{tpu_custom_call.1} parent=1 // pred_fallthru
      _
    // Predicated region
    $region10: #{tpu_custom_call.1} parent=1 // pred_check
      _
    $region11: #{tpu_custom_call.1} parent=1 // pred_check_branch
      %14 = sbr.rel (0) target = $region13
    $region12: #{tpu_custom_call.1} parent=1 // pred_region
      _
    $region13: #{tpu_custom_call.1} parent=1 // pred_fallthru
      _
    %v15 = vld [vmem:[%s0] sm:$0xff]
    %v16 = vld [vmem:[%s0 + $0x8] sm:$0xff]
    %v17 = vld [vmem:[%s0 + $0x10] sm:$0xff]
    %v18 = vld [vmem:[%s0 + $0x18] sm:$0xff]
    %v19 = vld [vmem:[%s1] sm:$0xff]
    %v20 = vld [vmem:[%s1 + $0x8] sm:$0xff]
    %v21 = vld [vmem:[%s1 + $0x10] sm:$0xff]
    %v22 = vld [vmem:[%s1 + $0x18] sm:$0xff]
    %v23 = vld [vmem:[%s2] sm:$0xff]
    %v24 = vld [vmem:[%s2 + $0x8] sm:$0xff]
    %v25 = vld [vmem:[%s2 + $0x10] sm:$0xff]
    %v26 = vld [vmem:[%s2 + $0x18] sm:$0xff]
    %v27 = vlaneseq
    %v28 = vand.u32 %v27, 127
    %29 = vset.pattern.permute.xlu0 0
    %30 = vperm.xlu0 %29, %v19
    %v31 = vpop.permute.xlu0 %30
    %32 = vset.pattern.permute.xlu0 0
    %33 = vperm.xlu0 %32, %v20
    %v34 = vpop.permute.xlu0 %33
    %35 = vset.pattern.permute.xlu0 0
    %36 = vperm.xlu0 %35, %v21
    %v37 = vpop.permute.xlu0 %36
    %38 = vset.pattern.permute.xlu0 0
    %39 = vperm.xlu0 %38, %v22
    %v40 = vpop.permute.xlu0 %39
    %vm41 = vcmp.eq.s32.totalorder %v28, %v31
    %vm42 = vcmp.eq.s32.totalorder %v28, %v34
    %vm43 = vcmp.eq.s32.totalorder %v28, %v37
    %vm44 = vcmp.eq.s32.totalorder %v28, %v40
    %v45 = vsel %vm41, %v15, 0.0
    %v46 = vsel %vm42, %v16, 0.0
    %v47 = vsel %vm43, %v17, 0.0
    %v48 = vsel %vm44, %v18, 0.0
    %49 = vadd.xlane.f32.xlu0 %v45
    %v50 = vpop.xlane.xlu0 %49
    %51 = vadd.xlane.f32.xlu0 %v46
    %v52 = vpop.xlane.xlu0 %51
    %53 = vadd.xlane.f32.xlu0 %v47
    %v54 = vpop.xlane.xlu0 %53
    %55 = vadd.xlane.f32.xlu0 %v48
    %v56 = vpop.xlane.xlu0 %55
    %v57 = vsub.f32 0.0, %v50
    %v58 = vsub.f32 0.0, %v52
    %v59 = vsub.f32 0.0, %v54
    %v60 = vsub.f32 0.0, %v56
    %v61 = vmul.f32 %v57, %v23
    %v62 = vmul.f32 %v58, %v24
    %v63 = vmul.f32 %v59, %v25
    %v64 = vmul.f32 %v60, %v26
    %vm65 = vcmask 7168
    %v66 = vsel %vm65, %v61, 0.0
    %v67 = vsel %vm65, %v62, 0.0
    %v68 = vadd.f32 %v66, %v67
    %v69 = vsel %vm65, %v63, 0.0
    %v70 = vadd.f32 %v68, %v69
    %v71 = vsel %vm65, %v64, 0.0
    %v72 = vadd.f32 %v70, %v71
    %73 = vadd.xlane.f32.xlu0 %v72
    %v74 = vpop.xlane.xlu0 %73
    %v75 = vrot.slane %v74, 4
    %v76 = vadd.f32 %v74, %v75
    %v77 = vrot.slane %v76, 2
    %v78 = vadd.f32 %v76, %v77
    %v79 = vrot.slane %v78, 1
    %v80 = vadd.f32 %v78, %v79
    %s81 = vtos %v80
    %v82 = vstv %s81
    %83 = vst [vmem:[#allocation2] sm:$0x1] %v82
    // Predicated region
    $region14: #{tpu_custom_call.1} parent=1 // pred_check
      _
    $region15: #{tpu_custom_call.1} parent=1 // pred_check_branch
      %85 = sbr.rel (0) target = $region17
    $region16: #{tpu_custom_call.1} parent=1 // pred_region
      %s87 = ssub.s32 16, 16
      %88 = vsyncadd [#allocation3], %s87
      %s90 = sshll.u32 [#allocation2], 4
      %s91 = int_to_ptr.vmem [resolvable:$true] %s90
      %93 = dma.vmem_to_hbm [thread:$0]  %s91, 16, %s3, [#allocation3]
    $region17: #{tpu_custom_call.1} parent=1 // pred_fallthru
      _
    // Predicated region
    $region18: #{tpu_custom_call.1} parent=1 // pred_check
      _
    $region19: #{tpu_custom_call.1} parent=1 // pred_check_branch
      %95 = sbr.rel (0) target = $region21
    $region20: #{tpu_custom_call.1} parent=1 // pred_region
      %96 = dma.done [#allocation3], 16
    $region21: #{tpu_custom_call.1} parent=1 // pred_fallthru
      _
    %97 = vsyncpa [#allocation3], 1

</llo_original>
